<compile_context>
chip_gen: v5e
topology: v5e:2x2
jax: 0.10.0
libtpu: 0.0.40
codegen_flags: <defaults>
</compile_context>

<pallas_src>
import functools

import numpy as np
import jax
import jax.numpy as jnp
from jax.experimental import pallas as pl
from jax.experimental.pallas import tpu as pltpu


# ----------------------------------------------------------------------------
# small helpers
# ----------------------------------------------------------------------------
def _cdiv(a, b):
    return -(-a // b)


def _round_up(x, m):
    return _cdiv(x, m) * m


def _vmem_cap_bytes():
    try:
        info = pltpu.get_tpu_info()
        cap = getattr(info, "vmem_capacity_bytes", None)
        if cap:
            return int(cap)
    except Exception:
        pass
    return 64 * 1024 * 1024  # conservative: v7x per-TensorCore VMEM


def _clamp_vmem(requested, cap):
    return int(min(max(requested, 32 * 1024 * 1024), int(0.8 * cap)))


# ----------------------------------------------------------------------------
# kernels
# ----------------------------------------------------------------------------
def _folded_kernel(x_ref, w_ref, b_ref, o_ref, *, activate, negative_slope,
                   act_scale):
    """Path A: one lane-dense matmul per tile.

    x_ref : (tile_p, k*k*C_in)     bf16  tap-folded pixels
    w_ref : (k*k*C_in, C_out_pad)  bf16
    b_ref : (1, C_out_pad)         f32
    o_ref : (tile_p, C_out_pad)
    """
    acc = jnp.dot(x_ref[...], w_ref[...], preferred_element_type=jnp.float32)
    acc = acc + b_ref[...]
    if activate:
        acc = jnp.where(acc >= 0.0, acc, negative_slope * acc) * act_scale
    o_ref[...] = acc.astype(o_ref.dtype)


def _tap_kernel(x_ref, w_ref, b_ref, o_ref, *, k, w_pad, tile_rows, activate,
                negative_slope, act_scale):
    """Path B: per-tap accumulation over the resident padded image.

    x_ref : (h_buf*w_pad, C_in)       bf16  full padded image (per batch elem)
    w_ref : (k*k, C_in, C_out_pad)    bf16
    b_ref : (1, C_out_pad)            f32
    o_ref : (tile_rows, C_out_pad)
    """
    base = pl.multiple_of(pl.program_id(1) * tile_rows, 8)
    acc = jnp.zeros((tile_rows, o_ref.shape[-1]), jnp.float32)
    for tap in range(k * k):
        dy, dx = divmod(tap, k)
        # Contiguous tap-shifted slice of the flattened padded image.
        xs = x_ref[pl.ds(base + dy * w_pad + dx, tile_rows), :]
        acc = acc + jnp.dot(xs, w_ref[tap], preferred_element_type=jnp.float32)
    acc = acc + b_ref[...]
    if activate:
        acc = jnp.where(acc >= 0.0, acc, negative_slope * acc) * act_scale
    o_ref[...] = acc.astype(o_ref.dtype)


# ----------------------------------------------------------------------------
# wrapper
# ----------------------------------------------------------------------------
def volume_render_disc_conv2d(x, weight, bias=None, *, stride=1, padding=0,
                              activate=False, negative_slope=0.2,
                              act_scale=1.0, fold_taps=None,
                              mxu_dtype=jnp.bfloat16, out_dtype=jnp.float32,
                              tile_rows_target=None):
    """Pallas forward of VolumeRenderDiscConv2d.

    x      : (B, C_in, H, W) NCHW (PyTorch layout)
    weight : (C_out, C_in, k, k)
    bias   : (C_out,) or None.  When activate=True it is the FusedLeakyReLU
             bias (conv is bias-free, matching the module); when
             activate=False it is the Conv2d bias.  Mathematically both are
             "add before the (optional) activation".
    mxu_dtype: matmul operand dtype.  bf16 by default; pass jnp.float32 for
             closer bit-fidelity to the f32 PyTorch conv at large k*k*C_in.
    """
    B, C_in, H, W = x.shape
    C_out, C_in_w, k, k2 = weight.shape
    assert C_in_w == C_in and k == k2 and stride >= 1

    h_out = (H + 2 * padding - k) // stride + 1
    w_out = (W + 2 * padding - k) // stride + 1
    assert h_out >= 1 and w_out >= 1

    vmem_cap = _vmem_cap_bytes()
    if tile_rows_target is None:
        # Bigger row tiles amortize per-grid-step overhead on 128 MiB parts
        # (v5e/v6e); keep the smaller default on v7x's 64 MiB VMEM.
        tile_rows_target = 2048 if vmem_cap >= (96 << 20) else 1024

    if fold_taps is None:
        # Folding expands input HBM traffic by k*k, so only do it when C_in is
        # small (the regime where the per-tap path is load/store-slot bound).
        fold_taps = (k == 1) or (C_in <= 32)

    C_out_pad = _round_up(C_out, 128)          # lane-dense output/accumulator
    out_itemsize = np.dtype(out_dtype).itemsize

    # Bias (f32), padded to the lane-dense width.
    b2d = (jnp.zeros((1, C_out), jnp.float32) if bias is None
           else bias.reshape(1, C_out).astype(jnp.float32))
    b2d = jnp.pad(b2d, ((0, 0), (0, C_out_pad - C_out)))

    # NHWC activations in the MXU dtype (bf16 halves resident VMEM + DMA).
    x_nhwc = jnp.transpose(x, (0, 2, 3, 1)).astype(mxu_dtype)

    # Per-tap weights (k, k, C_in, C_out_pad) in the MXU dtype.
    w_taps = jnp.transpose(weight, (2, 3, 1, 0)).astype(jnp.float32)
    w_taps = jnp.pad(w_taps, ((0, 0), (0, 0), (0, 0), (0, C_out_pad - C_out)))
    w_taps = w_taps.astype(mxu_dtype)

    # ------------------------------------------------------------------ Path A
    if fold_taps:
        K = k * k * C_in
        x_pad = jnp.pad(x_nhwc, ((0, 0), (padding, padding),
                                 (padding, padding), (0, 0)))
        taps = []
        for dy in range(k):
            for dx in range(k):
                taps.append(x_pad[:, dy:dy + stride * (h_out - 1) + 1:stride,
                                  dx:dx + stride * (w_out - 1) + 1:stride, :])
        x_f = taps[0] if len(taps) == 1 else jnp.concatenate(taps, axis=-1)
        P = h_out * w_out
        x_f = x_f.reshape(B, P, K)

        if P <= tile_rows_target:
            tile_p, P_pad = P, P                        # single full-extent tile
        else:
            n_guess = _cdiv(P, tile_rows_target)
            tile_p = _round_up(_cdiv(P, n_guess), 8)    # sublane-aligned tiles
            P_pad = _round_up(P, tile_p)
        if P_pad != P:
            x_f = jnp.pad(x_f, ((0, 0), (0, P_pad - P), (0, 0)))
        n_t = P_pad // tile_p

        w_flat = w_taps.reshape(K, C_out_pad)

        kernel = functools.partial(_folded_kernel, activate=activate,
                                   negative_slope=negative_slope,
                                   act_scale=act_scale)
        needed = (2 * tile_p * (K * x_f.dtype.itemsize
                                + C_out_pad * out_itemsize)
                  + 2 * K * C_out_pad * w_flat.dtype.itemsize + (1 << 20))

        out_flat = pl.pallas_call(
            kernel,
            out_shape=jax.ShapeDtypeStruct((B, P_pad, C_out_pad), out_dtype),
            grid=(B, n_t),
            in_specs=[
                pl.BlockSpec((None, tile_p, K), lambda b, t: (b, t, 0)),
                pl.BlockSpec((K, C_out_pad), lambda b, t: (0, 0)),
                pl.BlockSpec((1, C_out_pad), lambda b, t: (0, 0)),
            ],
            out_specs=pl.BlockSpec((None, tile_p, C_out_pad),
                                   lambda b, t: (b, t, 0)),
            compiler_params=pltpu.CompilerParams(
                dimension_semantics=("parallel", "parallel"),
                vmem_limit_bytes=_clamp_vmem(needed, vmem_cap)),
        )(x_f, w_flat, b2d)

        out = out_flat[:, :P, :C_out].reshape(B, h_out, w_out, C_out)
        return jnp.transpose(out, (0, 3, 1, 2)).astype(out_dtype)

    # ------------------------------------------------------------------ Path B
    w_pad_cols = W + 2 * padding
    h_conv = H + 2 * padding - k + 1          # stride-1 output rows
    w_conv = W + 2 * padding - k + 1

    flat = h_conv * w_pad_cols
    if flat <= tile_rows_target:
        tile_h, h_rows_pad = h_conv, h_conv   # single full-extent tile
    else:
        n_guess = _cdiv(flat, tile_rows_target)
        tile_h = _round_up(_cdiv(h_conv, n_guess), 8)
        h_rows_pad = _round_up(h_conv, tile_h)
    n_t = h_rows_pad // tile_h
    tile_rows = tile_h * w_pad_cols

    # Extra zero rows at the bottom so every tap-shifted slice stays in bounds.
    h_buf = h_rows_pad + (k if k > 1 else 0)
    x_buf = jnp.pad(x_nhwc, ((0, 0),
                             (padding, h_buf - H - padding),
                             (padding, padding),
                             (0, 0)))
    x_flat = x_buf.reshape(B, h_buf * w_pad_cols, C_in)

    w_k = w_taps.reshape(k * k, C_in, C_out_pad)

    kernel = functools.partial(_tap_kernel, k=k, w_pad=w_pad_cols,
                               tile_rows=tile_rows, activate=activate,
                               negative_slope=negative_slope,
                               act_scale=act_scale)
    needed = (2 * h_buf * w_pad_cols * C_in * x_flat.dtype.itemsize
              + 2 * k * k * C_in * C_out_pad * w_k.dtype.itemsize
              + 2 * tile_rows * C_out_pad * out_itemsize + (1 << 20))

    # Batch axis on the megacore "parallel" axis so v7x cores do not each hold
    # a copy of the resident image; the tile axis stays "arbitrary".
    sem = ("parallel", "arbitrary") if B > 1 else ("arbitrary", "parallel")

    out_flat = pl.pallas_call(
        kernel,
        out_shape=jax.ShapeDtypeStruct((B, h_rows_pad * w_pad_cols, C_out_pad),
                                       out_dtype),
        grid=(B, n_t),
        in_specs=[
            # Full padded image: block index ignores the tile axis -> fetched
            # once per batch element and kept resident in VMEM.
            pl.BlockSpec((None, h_buf * w_pad_cols, C_in),
                         lambda b, t: (b, 0, 0)),
            pl.BlockSpec((k * k, C_in, C_out_pad), lambda b, t: (0, 0, 0)),
            pl.BlockSpec((1, C_out_pad), lambda b, t: (0, 0)),
        ],
        out_specs=pl.BlockSpec((None, tile_rows, C_out_pad),
                               lambda b, t: (b, t, 0)),
        compiler_params=pltpu.CompilerParams(
            dimension_semantics=sem,
            vmem_limit_bytes=_clamp_vmem(needed, vmem_cap)),
    )(x_flat, w_k, b2d)

    out = out_flat.reshape(B, h_rows_pad, w_pad_cols, C_out_pad)
    out = out[:, :h_conv, :w_conv, :C_out]
    if stride > 1:
        # TODO(synk): write only strided rows in-kernel instead of computing
        # the full stride-1 output and subsampling here (path B only).
        out = out[:, ::stride, ::stride, :]
    return jnp.transpose(out, (0, 3, 1, 2)).astype(out_dtype)


# ----------------------------------------------------------------------------
# pure-JAX reference (PyTorch module semantics)
# ----------------------------------------------------------------------------
def volume_render_disc_conv2d_reference(x, weight, bias=None, *, stride=1,
                                        padding=0, activate=False,
                                        negative_slope=0.2, act_scale=1.0):
    out = jax.lax.conv_general_dilated(
        x.astype(jnp.float32), weight.astype(jnp.float32),
        window_strides=(stride, stride),
        padding=((padding, padding), (padding, padding)),
        dimension_numbers=("NCHW", "OIHW", "NCHW"),
        precision=jax.lax.Precision.HIGHEST)
    if bias is not None:
        out = out + bias.reshape(1, -1, 1, 1)
    if activate:
        out = jnp.where(out >= 0.0, out, negative_slope * out) * act_scale
    return out


if __name__ == "__main__":
    B, C_IN, C_OUT, K, H, W = 2, 4, 8, 3, 16, 16

    key = jax.random.PRNGKey(0)
    kx, kw, kb1, kb2 = jax.random.split(key, 4)
    x = jax.random.normal(kx, (B, C_IN, H, W), dtype=jnp.float32)
    weight = jax.random.normal(kw, (C_OUT, C_IN, K, K), dtype=jnp.float32) * 0.2
    act_bias = jax.random.normal(kb1, (C_OUT,), dtype=jnp.float32) * 0.1
    conv_bias = jax.random.normal(kb2, (C_OUT,), dtype=jnp.float32) * 0.1

    # Case 1: activate=True (FusedLeakyReLU bias, scale=1), stride 1, folded path.
    out1 = jax.block_until_ready(
        volume_render_disc_conv2d(x, weight, act_bias, stride=1, padding=1,
                                  activate=True))
    ref1 = volume_render_disc_conv2d_reference(x, weight, act_bias, stride=1,
                                               padding=1, activate=True)
    assert out1.shape == (B, C_OUT, H, W), out1.shape
    err1 = float(jnp.max(jnp.abs(out1 - ref1)))
    assert err1 < 5e-2, err1

    # Case 2: activate=False, conv bias, stride 2, folded path (native stride).
    out2 = jax.block_until_ready(
        volume_render_disc_conv2d(x, weight, conv_bias, stride=2, padding=1,
                                  activate=False))
    ref2 = volume_render_disc_conv2d_reference(x, weight, conv_bias, stride=2,
                                               padding=1, activate=False)
    assert out2.shape == (B, C_OUT, H // 2, W // 2), out2.shape
    err2 = float(jnp.max(jnp.abs(out2 - ref2)))
    assert err2 < 5e-2, err2

    # Case 3: resident-image (per-tap) path, activate=True, stride 1.
    out3 = jax.block_until_ready(
        volume_render_disc_conv2d(x, weight, act_bias, stride=1, padding=1,
                                  activate=True, fold_taps=False))
    err3 = float(jnp.max(jnp.abs(out3 - ref1)))
    assert out3.shape == ref1.shape and err3 < 5e-2, (out3.shape, err3)

    # Case 4: resident-image path, activate=False, stride 2.
    out4 = jax.block_until_ready(
        volume_render_disc_conv2d(x, weight, conv_bias, stride=2, padding=1,
                                  activate=False, fold_taps=False))
    err4 = float(jnp.max(jnp.abs(out4 - ref2)))
    assert out4.shape == ref2.shape and err4 < 5e-2, (out4.shape, err4)

    print("KERNEL_OK")
</pallas_src>

<mosaic_0001>
module attributes {stable_mosaic.version = 11 : i64} {
  func.func @_folded_kernel(%arg0: i32, %arg1: i32, %arg2: memref<1x256x36xbf16, #tpu.memory_space<vmem>>, %arg3: memref<36x128xbf16, #tpu.memory_space<vmem>>, %arg4: memref<1x128xf32, #tpu.memory_space<vmem>>, %arg5: memref<1x256x128xf32, #tpu.memory_space<vmem>>) attributes {dimension_semantics = [#tpu.dimension_semantics<parallel>, #tpu.dimension_semantics<parallel>], iteration_bounds = array<i64: 2, 1>, scalar_prefetch = 0 : i64, scratch_operands = 0 : i64, tpu.core_type = #tpu.core_type<tc>, window_params = [{transform_indices = @transform_0, window_bounds = array<i64: 1, 256, 36>}, {pipeline_mode = #tpu.pipeline_mode<synchronous>, transform_indices = @transform_1, window_bounds = array<i64: 36, 128>}, {pipeline_mode = #tpu.pipeline_mode<synchronous>, transform_indices = @transform_2, window_bounds = array<i64: 1, 128>}, {transform_indices = @transform_3, window_bounds = array<i64: 1, 256, 128>}]} {
    %c0 = arith.constant 0 : index
    %c0_0 = arith.constant 0 : index
    %c0_1 = arith.constant 0 : index
    %0 = vector.load %arg2[%c0, %c0_0, %c0_1] : memref<1x256x36xbf16, #tpu.memory_space<vmem>>, vector<1x256x36xbf16>
    %1 = vector.shape_cast %0 : vector<1x256x36xbf16> to vector<256x36xbf16>
    %c0_2 = arith.constant 0 : index
    %c0_3 = arith.constant 0 : index
    %2 = vector.load %arg3[%c0_2, %c0_3] : memref<36x128xbf16, #tpu.memory_space<vmem>>, vector<36x128xbf16>
    %cst = arith.constant dense<0.000000e+00> : vector<256x128xf32>
    %3 = tpu.matmul %1, %2, %cst {dimension_numbers = #tpu.dot_dimension_numbers<[1], [0], [0], [1], [0, 0, 1, 1], [], []>} : vector<256x36xbf16>, vector<36x128xbf16>, vector<256x128xf32> -> vector<256x128xf32>
    %c0_4 = arith.constant 0 : index
    %c0_5 = arith.constant 0 : index
    %4 = vector.load %arg4[%c0_4, %c0_5] : memref<1x128xf32, #tpu.memory_space<vmem>>, vector<1x128xf32>
    %5 = vector.broadcast %4 : vector<1x128xf32> to vector<256x128xf32>
    %6 = arith.addf %3, %5 : vector<256x128xf32>
    %cst_6 = arith.constant 0.000000e+00 : f32
    %7 = vector.broadcast %cst_6 : f32 to vector<256x128xf32>
    %8 = arith.cmpf oge, %6, %7 : vector<256x128xf32>
    %cst_7 = arith.constant 2.000000e-01 : f32
    %9 = vector.broadcast %cst_7 : f32 to vector<256x128xf32>
    %10 = arith.mulf %9, %6 : vector<256x128xf32>
    %11 = arith.select %8, %6, %10 : vector<256x128xi1>, vector<256x128xf32>
    %cst_8 = arith.constant 1.000000e+00 : f32
    %12 = vector.broadcast %cst_8 : f32 to vector<256x128xf32>
    %13 = arith.mulf %11, %12 : vector<256x128xf32>
    %c0_9 = arith.constant 0 : index
    %c0_10 = arith.constant 0 : index
    %c0_11 = arith.constant 0 : index
    %14 = vector.load %arg5[%c0_9, %c0_10, %c0_11] : memref<1x256x128xf32, #tpu.memory_space<vmem>>, vector<1x256x128xf32>
    %15 = vector.shape_cast %14 : vector<1x256x128xf32> to vector<256x128xf32>
    %16 = vector.shape_cast %13 : vector<256x128xf32> to vector<1x256x128xf32>
    tpu.vector_store %arg5[%c0_9, %c0_10, %c0_11], %16 {strides = array<i32>} : memref<1x256x128xf32, #tpu.memory_space<vmem>>, vector<1x256x128xf32>,
    return
  }
  func.func @transform_0(%arg0: i32, %arg1: i32) -> (i32, i32, i32) {
    %c0_i32 = arith.constant 0 : i32
    %c0_i32_0 = arith.constant 0 : i32
    return %arg0, %arg1, %c0_i32 : i32, i32, i32
  }
  func.func @transform_1(%arg0: i32, %arg1: i32) -> (i32, i32) {
    %c0_i32 = arith.constant 0 : i32
    %c0_i32_0 = arith.constant 0 : i32
    %c0_i32_1 = arith.constant 0 : i32
    return %c0_i32, %c0_i32_0 : i32, i32
  }
  func.func @transform_2(%arg0: i32, %arg1: i32) -> (i32, i32) {
    %c0_i32 = arith.constant 0 : i32
    %c0_i32_0 = arith.constant 0 : i32
    %c0_i32_1 = arith.constant 0 : i32
    return %c0_i32, %c0_i32_0 : i32, i32
  }
  func.func @transform_3(%arg0: i32, %arg1: i32) -> (i32, i32, i32) {
    %c0_i32 = arith.constant 0 : i32
    %c0_i32_0 = arith.constant 0 : i32
    return %arg0, %arg1, %c0_i32 : i32, i32, i32
  }
}

</mosaic_0001>

<llo_original>
// kernel: tpu_custom_call.1
$region0: #{tpu_custom_call.1}
  #allocation0 [shape = 'u32[]', space=smem, size = 0x4, offset = 0x4, fixed_abs, tag = 'smem constant byte address 0x4 - core index']
  #allocation1 [shape = 'u32[72,128]{1,0:T(1,128)}', space=vmem, size = 0x9000, scoped, tag = 'internal scratch']
  %s0 = inlined_call_operand.vmem [shape: bf16[2,256,36], index: 0, kind: input, shape index: {}]
  %s1 = inlined_call_operand.vmem [shape: bf16[36,128], index: 1, kind: input, shape index: {}]
  %s2 = inlined_call_operand.vmem [shape: f32[1,128], index: 2, kind: input, shape index: {}]
  %s3 = inlined_call_operand.hbm [shape: f32[2,256,128], index: 3, kind: output, shape index: {}]
  %s4 = sld [smem:[#allocation0]]
  $region45: #{tpu_custom_call.1} parent=0
    _
  %s6 = ssub.s32 1, %s4
  %s7 = scalar_select 0, %s6, %s4
  $region1: #{tpu_custom_call.1} parent=0
    #allocation2 [shape = 'u8[262144]{0}', space=vmem, size = 0x40000, scoped, tag = 'output window, operand 0']
    #allocation3 [shape = 's32[2]{0}', space=sflag, size = 0x8, scoped, tag = 'scoped memory for tpu_custom_call.1']
    %8 = vsyncpa [#allocation3], 0
    %s9 = scalar_lea.sflag [#allocation3], 1
    %10 = vsyncpa %s9, 0
    loop: start=0, step=1, limit=4
    $region2: #{tpu_custom_call.1} parent=1 // loop_pre_header
      _
    $region3: #{tpu_custom_call.1} parent=1 // loop_header
      %s12 = sphi 0, %s16
      %p13 = scmp.ge.s32.totalorder %s12, 4
      %s19 = sphi 0, %s31
      %s20 = sphi 0, %s27
      %s21 = sphi 0, %s19
      %s22 = sphi 0, %s20
      %s23 = sphi 0, %s21
      %s24 = sphi 0, %s22
      %s36 = sphi 0, %s38
      %s39 = sphi 0, %s36
      %s40 = sphi 0, %s39
      %s56 = sphi 0, %s40
      %s60 = sphi 0, %s60
      %s62 = sphi 0, %s60
      %s63 = sphi 0, %s62
      %s77 = sphi 0, %s63
      %s81 = sphi 0, %s81
      %s83 = sphi 0, %s81
      %s84 = sphi 0, %s83
      %s98 = sphi 0, %s84
      %s106 = sphi 0, %s108
      %s109 = sphi 0, %s106
      %s110 = sphi 0, %s109
      %s126 = sphi 0, %s110
    $region4: #{tpu_custom_call.1} parent=1 // loop_header_branch
      %15 = sbr.rel (%p13) target = $region8
    $region5: #{tpu_custom_call.1} parent=1 // loop_body
      %s17 = ssub.s32 %s12, 1
      %s18 = ssub.s32 %s12, 2
      %s25 = sadd.s32 1, %s20
      %p26 = scmp.ge.s32.totalorder %s25, 1
      %s27 = scalar_select %p26, 0, %s25
      %s28 = sadd.s32 1, %s19
      %s29 = scalar_select %p26, %s28, %s19
      %p30 = scmp.ge.s32.totalorder %s29, 2
      %s31 = scalar_select %p30, 0, %s29
      %s32 = ssub.s32 %s19, %s31
      %s33 = ssub.s32 %s20, %s27
      %s34 = sor.u32 %s32, %s33
      %p35 = scmp.eq.s32.totalorder %s34, 0
      %s37 = sadd.s32 %s36, 1
      %s38 = scalar_select %p35, %s36, %s37
      %p41 = pneg %p35
      %p42 = scmp.eq.s32.totalorder %s12, 1
      %p43 = por %p41, %p42
      %p44 = scmp.ne.s32.totalorder %s36, %s39
      %p45 = scmp.eq.s32.totalorder %s12, 0
      %p46 = por %p44, %p45
      %p47 = scmp.ne.s32.totalorder %s36, %s39
      %p48 = scmp.eq.s32.totalorder %s17, 1
      %p49 = por %p47, %p48
      %p50 = scmp.ne.s32.totalorder %s39, %s40
      %p51 = scmp.eq.s32.totalorder %s17, 0
      %p52 = por %p50, %p51
      %p53 = scmp.ne.s32.totalorder %s39, %s40
      %p54 = scmp.eq.s32.totalorder %s18, 1
      %p55 = por %p53, %p54
      %p57 = scmp.ne.s32.totalorder %s40, %s56
      %p58 = scmp.eq.s32.totalorder %s18, 0
      %p59 = por %p57, %p58
      %s61 = sadd.s32 %s60, 1
      %p64 = scmp.eq.s32.totalorder %s12, 1
      %p65 = scmp.ne.s32.totalorder %s60, %s62
      %p66 = scmp.eq.s32.totalorder %s12, 0
      %p67 = por %p65, %p66
      %p68 = scmp.ne.s32.totalorder %s60, %s62
      %p69 = scmp.eq.s32.totalorder %s17, 1
      %p70 = por %p68, %p69
      %p71 = scmp.ne.s32.totalorder %s62, %s63
      %p72 = scmp.eq.s32.totalorder %s17, 0
      %p73 = por %p71, %p72
      %p74 = scmp.ne.s32.totalorder %s62, %s63
      %p75 = scmp.eq.s32.totalorder %s18, 1
      %p76 = por %p74, %p75
      %p78 = scmp.ne.s32.totalorder %s63, %s77
      %p79 = scmp.eq.s32.totalorder %s18, 0
      %p80 = por %p78, %p79
      %s82 = sadd.s32 %s81, 1
      %p85 = scmp.eq.s32.totalorder %s12, 1
      %p86 = scmp.ne.s32.totalorder %s81, %s83
      %p87 = scmp.eq.s32.totalorder %s12, 0
      %p88 = por %p86, %p87
      %p89 = scmp.ne.s32.totalorder %s81, %s83
      %p90 = scmp.eq.s32.totalorder %s17, 1
      %p91 = por %p89, %p90
      %p92 = scmp.ne.s32.totalorder %s83, %s84
      %p93 = scmp.eq.s32.totalorder %s17, 0
      %p94 = por %p92, %p93
      %p95 = scmp.ne.s32.totalorder %s83, %s84
      %p96 = scmp.eq.s32.totalorder %s18, 1
      %p97 = por %p95, %p96
      %p99 = scmp.ne.s32.totalorder %s84, %s98
      %p100 = scmp.eq.s32.totalorder %s18, 0
      %p101 = por %p99, %p100
      %s102 = ssub.s32 %s19, %s31
      %s103 = ssub.s32 %s20, %s27
      %s104 = sor.u32 %s102, %s103
      %p105 = scmp.eq.s32.totalorder %s104, 0
      %s107 = sadd.s32 %s106, 1
      %s108 = scalar_select %p105, %s106, %s107
      %p111 = pneg %p105
      %p112 = scmp.eq.s32.totalorder %s12, 1
      %p113 = por %p111, %p112
      %p114 = scmp.ne.s32.totalorder %s106, %s109
      %p115 = scmp.eq.s32.totalorder %s12, 0
      %p116 = por %p114, %p115
      %p117 = scmp.ne.s32.totalorder %s106, %s109
      %p118 = scmp.eq.s32.totalorder %s17, 1
      %p119 = por %p117, %p118
      %p120 = scmp.ne.s32.totalorder %s109, %s110
      %p121 = scmp.eq.s32.totalorder %s17, 0
      %p122 = por %p120, %p121
      %p123 = scmp.ne.s32.totalorder %s109, %s110
      %p124 = scmp.eq.s32.totalorder %s18, 1
      %p125 = por %p123, %p124
      %p127 = scmp.ne.s32.totalorder %s110, %s126
      %p128 = scmp.eq.s32.totalorder %s18, 0
      %p129 = por %p127, %p128
      %p130 = scmp.le.s32.totalorder 1, %s12
      %p131 = scmp.lt.s32.totalorder %s12, 3
      %p132 = pnand %p130, %p131
      %p133 = pneg %p132
      // Predicated region
      $region9: #{tpu_custom_call.1} parent=5 // pred_check
        _
      $region10: #{tpu_custom_call.1} parent=5 // pred_check_branch
        %135 = sbr.rel (%p132) target = $region12
      $region11: #{tpu_custom_call.1} parent=5 // pred_region
        %s136 = ssub.s32 %s12, 1
        // Predicated region
        $region13: #{tpu_custom_call.1} parent=11 // pred_check
          %p137 = pneg %p73
        $region14: #{tpu_custom_call.1} parent=11 // pred_check_branch
          %139 = sbr.rel (%p137) target = $region16
        $region15: #{tpu_custom_call.1} parent=11 // pred_region
          _
        $region16: #{tpu_custom_call.1} parent=11 // pred_fallthru
          _
        // Predicated region
        $region17: #{tpu_custom_call.1} parent=11 // pred_check
          %p140 = pneg %p94
        $region18: #{tpu_custom_call.1} parent=11 // pred_check_branch
          %142 = sbr.rel (%p140) target = $region20
        $region19: #{tpu_custom_call.1} parent=11 // pred_region
          _
        $region20: #{tpu_custom_call.1} parent=11 // pred_fallthru
          _
      $region12: #{tpu_custom_call.1} parent=5 // pred_fallthru
        _
      %p143 = scmp.lt.s32.totalorder %s12, 2
      // Predicated region
      $region21: #{tpu_custom_call.1} parent=5 // pred_check
        %p144 = pneg %p143
      $region22: #{tpu_custom_call.1} parent=5 // pred_check_branch
        %146 = sbr.rel (%p144) target = $region24
      $region23: #{tpu_custom_call.1} parent=5 // pred_region
        // Predicated region
        $region25: #{tpu_custom_call.1} parent=23 // pred_check
          %p147 = pneg %p46
        $region26: #{tpu_custom_call.1} parent=23 // pred_check_branch
          %149 = sbr.rel (%p147) target = $region28
        $region27: #{tpu_custom_call.1} parent=23 // pred_region
          %s150 = smul.u32 32, %s20
          %p151 = scmp.lt.s32.totalorder %s19, 1
          %s152 = scalar_select %p151, %s19, 1
          %p153 = scmp.lt.s32.totalorder %s150, 31
          %s154 = scalar_select %p153, %s150, 31
          %s155 = smul.addr %s152, 32
          %s156 = sadd.s32 %s154, %s155
          %s157 = smul.addr %s156, 4
          %s158 = scalar_lea.vmem %s0, %s157
          %s159 = smul.u32 32, %s20
        $region28: #{tpu_custom_call.1} parent=23 // pred_fallthru
          _
      $region24: #{tpu_custom_call.1} parent=5 // pred_fallthru
        _
      %p160 = scmp.le.s32.totalorder 1, %s12
      %p161 = scmp.lt.s32.totalorder %s12, 3
      %p162 = pnand %p160, %p161
      %p163 = pneg %p162
      // Predicated region
      $region29: #{tpu_custom_call.1} parent=5 // pred_check
        _
      $region30: #{tpu_custom_call.1} parent=5 // pred_check_branch
        %165 = sbr.rel (%p162) target = $region32
      $region31: #{tpu_custom_call.1} parent=5 // pred_region
        %s166 = ssub.s32 %s12, 1
        %s167 = smul.u32 32, %s22
        %p168 = scmp.lt.s32.totalorder %s21, 1
        %s169 = scalar_select %p168, %s21, 1
        %p170 = scmp.lt.s32.totalorder %s167, 31
        %s171 = scalar_select %p170, %s167, 31
        %s172 = smul.addr %s169, 32
        %s173 = sadd.s32 %s171, %s172
        %s174 = smul.addr %s173, 4
        %s175 = scalar_lea.vmem %s0, %s174
        %p176 = pneg %p52
        %p177 = pneg %p49
        %p178 = pneg %p73
        %p179 = pneg %p70
        %p180 = pneg %p94
        %p181 = pneg %p91
        %p182 = pneg %p122
        %p183 = pneg %p119
        %s184 = sand.u32 %s109, 1
        %s185 = scalar_lea.sflag [#allocation3], %s184
        %s186 = sand.u32 %s109, 1
        %s187 = smul.addr %s186, 256
        %s188 = scalar_lea.vmem [#allocation2], %s187
        %s189 = smul.u32 32, %s22
        %p190 = scmp.lt.s32.totalorder %s21, 1
        %s191 = scalar_select %p190, %s21, 1
        %p192 = scmp.lt.s32.totalorder %s189, 31
        %s193 = scalar_select %p192, %s189, 31
        %s194 = smul.addr %s191, 32
        %s195 = sadd.s32 %s193, %s194
        %s196 = smul.addr %s195, 4
        %s197 = scalar_lea.vmem %s0, %s196
        %s198 = smul.u32 32, %s22
        %s199 = smul.u32 32, %s22
        %v201 = vld [vmem:[%s197] sm:$0xf]
        %v202 = vld [vmem:[%s197 + $0x4] sm:$0xf]
        %v203 = vld [vmem:[%s197 + $0x8] sm:$0xf]
        %v204 = vld [vmem:[%s197 + $0xc] sm:$0xf]
        %v205 = vld [vmem:[%s197 + $0x10] sm:$0xf]
        %v206 = vld [vmem:[%s197 + $0x14] sm:$0xf]
        %v207 = vld [vmem:[%s197 + $0x18] sm:$0xf]
        %v208 = vld [vmem:[%s197 + $0x1c] sm:$0xf]
        %v209 = vld [vmem:[%s197 + $0x20] sm:$0xf]
        %v210 = vld [vmem:[%s197 + $0x24] sm:$0xf]
        %v211 = vld [vmem:[%s197 + $0x28] sm:$0xf]
        %v212 = vld [vmem:[%s197 + $0x2c] sm:$0xf]
        %v213 = vld [vmem:[%s197 + $0x30] sm:$0xf]
        %v214 = vld [vmem:[%s197 + $0x34] sm:$0xf]
        %v215 = vld [vmem:[%s197 + $0x38] sm:$0xf]
        %v216 = vld [vmem:[%s197 + $0x3c] sm:$0xf]
        %v217 = vld [vmem:[%s197 + $0x40] sm:$0xf]
        %v218 = vld [vmem:[%s197 + $0x44] sm:$0xf]
        %v219 = vld [vmem:[%s197 + $0x48] sm:$0xf]
        %v220 = vld [vmem:[%s197 + $0x4c] sm:$0xf]
        %v221 = vld [vmem:[%s197 + $0x50] sm:$0xf]
        %v222 = vld [vmem:[%s197 + $0x54] sm:$0xf]
        %v223 = vld [vmem:[%s197 + $0x58] sm:$0xf]
        %v224 = vld [vmem:[%s197 + $0x5c] sm:$0xf]
        %v225 = vld [vmem:[%s197 + $0x60] sm:$0xf]
        %v226 = vld [vmem:[%s197 + $0x64] sm:$0xf]
        %v227 = vld [vmem:[%s197 + $0x68] sm:$0xf]
        %v228 = vld [vmem:[%s197 + $0x6c] sm:$0xf]
        %v229 = vld [vmem:[%s197 + $0x70] sm:$0xf]
        %v230 = vld [vmem:[%s197 + $0x74] sm:$0xf]
        %v231 = vld [vmem:[%s197 + $0x78] sm:$0xf]
        %v232 = vld [vmem:[%s197 + $0x7c] sm:$0xf]
        %v233 = vld [vmem:[%s1] sm:$0xf]
        %v234 = vld [vmem:[%s1 + $0x4] sm:$0xf]
        %v235 = vld [vmem:[%s1 + $0x8] sm:$0xf]
        %v236 = vld [vmem:[%s1 + $0xc] sm:$0xf]
        %v237 = vld [vmem:[%s1 + $0x10] sm:$0x3]
        %v238 = vld [vmem:[%s2] sm:$0x1]
        %v240 = vperm.slane %v238, 0
        %v274 = vunpack.c.l.b16 %v201
        %v275 = vunpack.c.l.b16 %v202
        %v276 = vunpack.c.l.b16 %v203
        %v277 = vunpack.c.l.b16 %v204
        %v278 = vunpack.c.l.b16 %v205
        %v279 = vunpack.c.l.b16 %v206
        %v280 = vunpack.c.l.b16 %v207
        %v281 = vunpack.c.l.b16 %v208
        %v282 = vunpack.c.l.b16 %v209
        %v283 = vunpack.c.l.b16 %v210
        %v284 = vunpack.c.l.b16 %v211
        %v285 = vunpack.c.l.b16 %v212
        %v286 = vunpack.c.l.b16 %v213
        %v287 = vunpack.c.l.b16 %v214
        %v288 = vunpack.c.l.b16 %v215
        %v289 = vunpack.c.l.b16 %v216
        %v290 = vunpack.c.l.b16 %v217
        %v291 = vunpack.c.l.b16 %v218
        %v292 = vunpack.c.l.b16 %v219
        %v293 = vunpack.c.l.b16 %v220
        %v294 = vunpack.c.l.b16 %v221
        %v295 = vunpack.c.l.b16 %v222
        %v296 = vunpack.c.l.b16 %v223
        %v297 = vunpack.c.l.b16 %v224
        %v298 = vunpack.c.l.b16 %v225
        %v299 = vunpack.c.l.b16 %v226
        %v300 = vunpack.c.l.b16 %v227
        %v301 = vunpack.c.l.b16 %v228
        %v302 = vunpack.c.l.b16 %v229
        %v303 = vunpack.c.l.b16 %v230
        %v304 = vunpack.c.l.b16 %v231
        %v305 = vunpack.c.l.b16 %v232
        %v306 = vpack.c.b16 %v275, %v274
        %v307 = vpack.c.b16 %v277, %v276
        %v308 = vpack.c.b16 %v279, %v278
        %v309 = vpack.c.b16 %v281, %v280
        %v310 = vpack.c.b16 %v283, %v282
        %v311 = vpack.c.b16 %v285, %v284
        %v312 = vpack.c.b16 %v287, %v286
        %v313 = vpack.c.b16 %v289, %v288
        %v314 = vpack.c.b16 %v291, %v290
        %v315 = vpack.c.b16 %v293, %v292
        %v316 = vpack.c.b16 %v295, %v294
        %v317 = vpack.c.b16 %v297, %v296
        %v318 = vpack.c.b16 %v299, %v298
        %v319 = vpack.c.b16 %v301, %v300
        %v320 = vpack.c.b16 %v303, %v302
        %v321 = vpack.c.b16 %v305, %v304
        %v327 = vunpack.c.l.b16 %v233
        %v328 = vunpack.c.l.b16 %v234
        %v329 = vunpack.c.l.b16 %v235
        %v330 = vunpack.c.l.b16 %v236
        %v331 = vunpack.c.l.b16 %v237
        %v332 = vpack.c.b16 %v328, %v327
        %v333 = vpack.c.b16 %v330, %v329
        %v334 = vpack.c.b16 %v331, %v331
        %vm337 = vcmask 293888
        %v339 = vsel %vm337, %v306, 0
        %v342 = vsel %vm337, %v307, 0
        %v345 = vsel %vm337, %v308, 0
        %v348 = vsel %vm337, %v309, 0
        %v351 = vsel %vm337, %v310, 0
        %v354 = vsel %vm337, %v311, 0
        %v357 = vsel %vm337, %v312, 0
        %v360 = vsel %vm337, %v313, 0
        %v363 = vsel %vm337, %v314, 0
        %v366 = vsel %vm337, %v315, 0
        %v369 = vsel %vm337, %v316, 0
        %v372 = vsel %vm337, %v317, 0
        %v375 = vsel %vm337, %v318, 0
        %v378 = vsel %vm337, %v319, 0
        %v381 = vsel %vm337, %v320, 0
        %v384 = vsel %vm337, %v321, 0
        %vm386 = vcmask 1041408
        %v388 = vsel %vm386, %v334, 0
        %390 = vmatpush.bf16.msra.mxu0 0
        %391 = vmatpush.bf16.msra.mxu0 0
        %392 = vmatpush.bf16.msra.mxu0 0
        %393 = vmatpush.bf16.msra.mxu0 0
        %394 = vmatpush.bf16.msra.mxu0 0
        %395 = vmatpush.bf16.msra.mxu0 %v388
        %396 = vmatpush.bf16.msra.mxu0 %v333
        %397 = vmatpush.bf16.msra.mxu0 %v332
        %398 = vmatmul.bf16.gmra.mxu0 %v339
        %v399 = vpop.f32.mrf.mxu0
        %v400 = vadd.f32 %v240, %v399
        %v401 = vpop.f32.mrf.mxu0
        %v402 = vadd.f32 %v240, %v401
        %403 = vmatmul.bf16.gmra.mxu0 %v342
        %v404 = vpop.f32.mrf.mxu0
        %v405 = vadd.f32 %v240, %v404
        %v406 = vpop.f32.mrf.mxu0
        %v407 = vadd.f32 %v240, %v406
        %408 = vmatmul.bf16.gmra.mxu0 %v345
        %v409 = vpop.f32.mrf.mxu0
        %v410 = vadd.f32 %v240, %v409
        %v411 = vpop.f32.mrf.mxu0
        %v412 = vadd.f32 %v240, %v411
        %413 = vmatmul.bf16.gmra.mxu0 %v348
        %v414 = vpop.f32.mrf.mxu0
        %v415 = vadd.f32 %v240, %v414
        %v416 = vpop.f32.mrf.mxu0
        %v417 = vadd.f32 %v240, %v416
        %418 = vmatmul.bf16.gmra.mxu0 %v351
        %v419 = vpop.f32.mrf.mxu0
        %v420 = vadd.f32 %v240, %v419
        %v421 = vpop.f32.mrf.mxu0
        %v422 = vadd.f32 %v240, %v421
        %423 = vmatmul.bf16.gmra.mxu0 %v354
        %v424 = vpop.f32.mrf.mxu0
        %v425 = vadd.f32 %v240, %v424
        %v426 = vpop.f32.mrf.mxu0
        %v427 = vadd.f32 %v240, %v426
        %428 = vmatmul.bf16.gmra.mxu0 %v357
        %v429 = vpop.f32.mrf.mxu0
        %v430 = vadd.f32 %v240, %v429
        %v431 = vpop.f32.mrf.mxu0
        %v432 = vadd.f32 %v240, %v431
        %433 = vmatmul.bf16.gmra.mxu0 %v360
        %v434 = vpop.f32.mrf.mxu0
        %v435 = vadd.f32 %v240, %v434
        %v436 = vpop.f32.mrf.mxu0
        %v437 = vadd.f32 %v240, %v436
        %438 = vmatmul.bf16.gmra.mxu0 %v363
        %v439 = vpop.f32.mrf.mxu0
        %v440 = vadd.f32 %v240, %v439
        %v441 = vpop.f32.mrf.mxu0
        %v442 = vadd.f32 %v240, %v441
        %443 = vmatmul.bf16.gmra.mxu0 %v366
        %v444 = vpop.f32.mrf.mxu0
        %v445 = vadd.f32 %v240, %v444
        %v446 = vpop.f32.mrf.mxu0
        %v447 = vadd.f32 %v240, %v446
        %448 = vmatmul.bf16.gmra.mxu0 %v369
        %v449 = vpop.f32.mrf.mxu0
        %v450 = vadd.f32 %v240, %v449
        %v451 = vpop.f32.mrf.mxu0
        %v452 = vadd.f32 %v240, %v451
        %453 = vmatmul.bf16.gmra.mxu0 %v372
        %v454 = vpop.f32.mrf.mxu0
        %v455 = vadd.f32 %v240, %v454
        %v456 = vpop.f32.mrf.mxu0
        %v457 = vadd.f32 %v240, %v456
        %458 = vmatmul.bf16.gmra.mxu0 %v375
        %v459 = vpop.f32.mrf.mxu0
        %v460 = vadd.f32 %v240, %v459
        %v461 = vpop.f32.mrf.mxu0
        %v462 = vadd.f32 %v240, %v461
        %463 = vmatmul.bf16.gmra.mxu0 %v378
        %v464 = vpop.f32.mrf.mxu0
        %v465 = vadd.f32 %v240, %v464
        %v466 = vpop.f32.mrf.mxu0
        %v467 = vadd.f32 %v240, %v466
        %468 = vmatmul.bf16.gmra.mxu0 %v381
        %v469 = vpop.f32.mrf.mxu0
        %v470 = vadd.f32 %v240, %v469
        %v471 = vpop.f32.mrf.mxu0
        %v472 = vadd.f32 %v240, %v471
        %473 = vmatmul.bf16.gmra.mxu0 %v384
        %v474 = vpop.f32.mrf.mxu0
        %v475 = vadd.f32 %v240, %v474
        %v476 = vpop.f32.mrf.mxu0
        %v477 = vadd.f32 %v240, %v476
        %478 = vdwg.mxu0
        %vm479 = vcmp.ge.f32.partialorder %v400, 0.0
        %vm480 = vcmp.ge.f32.partialorder %v402, 0.0
        %vm481 = vcmp.ge.f32.partialorder %v405, 0.0
        %vm482 = vcmp.ge.f32.partialorder %v407, 0.0
        %vm483 = vcmp.ge.f32.partialorder %v410, 0.0
        %vm484 = vcmp.ge.f32.partialorder %v412, 0.0
        %vm485 = vcmp.ge.f32.partialorder %v415, 0.0
        %vm486 = vcmp.ge.f32.partialorder %v417, 0.0
        %vm487 = vcmp.ge.f32.partialorder %v420, 0.0
        %vm488 = vcmp.ge.f32.partialorder %v422, 0.0
        %vm489 = vcmp.ge.f32.partialorder %v425, 0.0
        %vm490 = vcmp.ge.f32.partialorder %v427, 0.0
        %vm491 = vcmp.ge.f32.partialorder %v430, 0.0
        %vm492 = vcmp.ge.f32.partialorder %v432, 0.0
        %vm493 = vcmp.ge.f32.partialorder %v435, 0.0
        %vm494 = vcmp.ge.f32.partialorder %v437, 0.0
        %vm495 = vcmp.ge.f32.partialorder %v440, 0.0
        %vm496 = vcmp.ge.f32.partialorder %v442, 0.0
        %vm497 = vcmp.ge.f32.partialorder %v445, 0.0
        %vm498 = vcmp.ge.f32.partialorder %v447, 0.0
        %vm499 = vcmp.ge.f32.partialorder %v450, 0.0
        %vm500 = vcmp.ge.f32.partialorder %v452, 0.0
        %vm501 = vcmp.ge.f32.partialorder %v455, 0.0
        %vm502 = vcmp.ge.f32.partialorder %v457, 0.0
        %vm503 = vcmp.ge.f32.partialorder %v460, 0.0
        %vm504 = vcmp.ge.f32.partialorder %v462, 0.0
        %vm505 = vcmp.ge.f32.partialorder %v465, 0.0
        %vm506 = vcmp.ge.f32.partialorder %v467, 0.0
        %vm507 = vcmp.ge.f32.partialorder %v470, 0.0
        %vm508 = vcmp.ge.f32.partialorder %v472, 0.0
        %vm509 = vcmp.ge.f32.partialorder %v475, 0.0
        %vm510 = vcmp.ge.f32.partialorder %v477, 0.0
        %v511 = vmul.f32 %v400, 0.2
        %v512 = vmul.f32 %v402, 0.2
        %v513 = vmul.f32 %v405, 0.2
        %v514 = vmul.f32 %v407, 0.2
        %v515 = vmul.f32 %v410, 0.2
        %v516 = vmul.f32 %v412, 0.2
        %v517 = vmul.f32 %v415, 0.2
        %v518 = vmul.f32 %v417, 0.2
        %v519 = vmul.f32 %v420, 0.2
        %v520 = vmul.f32 %v422, 0.2
        %v521 = vmul.f32 %v425, 0.2
        %v522 = vmul.f32 %v427, 0.2
        %v523 = vmul.f32 %v430, 0.2
        %v524 = vmul.f32 %v432, 0.2
        %v525 = vmul.f32 %v435, 0.2
        %v526 = vmul.f32 %v437, 0.2
        %v527 = vmul.f32 %v440, 0.2
        %v528 = vmul.f32 %v442, 0.2
        %v529 = vmul.f32 %v445, 0.2
        %v530 = vmul.f32 %v447, 0.2
        %v531 = vmul.f32 %v450, 0.2
        %v532 = vmul.f32 %v452, 0.2
        %v533 = vmul.f32 %v455, 0.2
        %v534 = vmul.f32 %v457, 0.2
        %v535 = vmul.f32 %v460, 0.2
        %v536 = vmul.f32 %v462, 0.2
        %v537 = vmul.f32 %v465, 0.2
        %v538 = vmul.f32 %v467, 0.2
        %v539 = vmul.f32 %v470, 0.2
        %v540 = vmul.f32 %v472, 0.2
        %v541 = vmul.f32 %v475, 0.2
        %v542 = vmul.f32 %v477, 0.2
        %v543 = vsel %vm479, %v400, %v511
        %v544 = vsel %vm480, %v402, %v512
        %v545 = vsel %vm481, %v405, %v513
        %v546 = vsel %vm482, %v407, %v514
        %v547 = vsel %vm483, %v410, %v515
        %v548 = vsel %vm484, %v412, %v516
        %v549 = vsel %vm485, %v415, %v517
        %v550 = vsel %vm486, %v417, %v518
        %v551 = vsel %vm487, %v420, %v519
        %v552 = vsel %vm488, %v422, %v520
        %v553 = vsel %vm489, %v425, %v521
        %v554 = vsel %vm490, %v427, %v522
        %v555 = vsel %vm491, %v430, %v523
        %v556 = vsel %vm492, %v432, %v524
        %v557 = vsel %vm493, %v435, %v525
        %v558 = vsel %vm494, %v437, %v526
        %v559 = vsel %vm495, %v440, %v527
        %v560 = vsel %vm496, %v442, %v528
        %v561 = vsel %vm497, %v445, %v529
        %v562 = vsel %vm498, %v447, %v530
        %v563 = vsel %vm499, %v450, %v531
        %v564 = vsel %vm500, %v452, %v532
        %v565 = vsel %vm501, %v455, %v533
        %v566 = vsel %vm502, %v457, %v534
        %v567 = vsel %vm503, %v460, %v535
        %v568 = vsel %vm504, %v462, %v536
        %v569 = vsel %vm505, %v465, %v537
        %v570 = vsel %vm506, %v467, %v538
        %v571 = vsel %vm507, %v470, %v539
        %v572 = vsel %vm508, %v472, %v540
        %v573 = vsel %vm509, %v475, %v541
        %v574 = vsel %vm510, %v477, %v542
        %575 = vst [vmem:[%s188] sm:$0xff] %v543
        %576 = vst [vmem:[%s188 + $0x8] sm:$0xff] %v544
        %577 = vst [vmem:[%s188 + $0x10] sm:$0xff] %v545
        %578 = vst [vmem:[%s188 + $0x18] sm:$0xff] %v546
        %579 = vst [vmem:[%s188 + $0x20] sm:$0xff] %v547
        %580 = vst [vmem:[%s188 + $0x28] sm:$0xff] %v548
        %581 = vst [vmem:[%s188 + $0x30] sm:$0xff] %v549
        %582 = vst [vmem:[%s188 + $0x38] sm:$0xff] %v550
        %583 = vst [vmem:[%s188 + $0x40] sm:$0xff] %v551
        %584 = vst [vmem:[%s188 + $0x48] sm:$0xff] %v552
        %585 = vst [vmem:[%s188 + $0x50] sm:$0xff] %v553
        %586 = vst [vmem:[%s188 + $0x58] sm:$0xff] %v554
        %587 = vst [vmem:[%s188 + $0x60] sm:$0xff] %v555
        %588 = vst [vmem:[%s188 + $0x68] sm:$0xff] %v556
        %589 = vst [vmem:[%s188 + $0x70] sm:$0xff] %v557
        %590 = vst [vmem:[%s188 + $0x78] sm:$0xff] %v558
        %591 = vst [vmem:[%s188 + $0x80] sm:$0xff] %v559
        %592 = vst [vmem:[%s188 + $0x88] sm:$0xff] %v560
        %593 = vst [vmem:[%s188 + $0x90] sm:$0xff] %v561
        %594 = vst [vmem:[%s188 + $0x98] sm:$0xff] %v562
        %595 = vst [vmem:[%s188 + $0xa0] sm:$0xff] %v563
        %596 = vst [vmem:[%s188 + $0xa8] sm:$0xff] %v564
        %597 = vst [vmem:[%s188 + $0xb0] sm:$0xff] %v565
        %598 = vst [vmem:[%s188 + $0xb8] sm:$0xff] %v566
        %599 = vst [vmem:[%s188 + $0xc0] sm:$0xff] %v567
        %600 = vst [vmem:[%s188 + $0xc8] sm:$0xff] %v568
        %601 = vst [vmem:[%s188 + $0xd0] sm:$0xff] %v569
        %602 = vst [vmem:[%s188 + $0xd8] sm:$0xff] %v570
        %603 = vst [vmem:[%s188 + $0xe0] sm:$0xff] %v571
        %604 = vst [vmem:[%s188 + $0xe8] sm:$0xff] %v572
        %605 = vst [vmem:[%s188 + $0xf0] sm:$0xff] %v573
        %606 = vst [vmem:[%s188 + $0xf8] sm:$0xff] %v574
        %s607 = sand.u32 %s109, 1
        %s608 = scalar_lea.sflag [#allocation3], %s607
        %s609 = sand.u32 %s109, 1
        %s610 = smul.addr %s609, 256
        %s611 = scalar_lea.vmem [#allocation2], %s610
        // Predicated region
        $region33: #{tpu_custom_call.1} parent=31 // pred_check
          %p612 = pneg %p119
        $region34: #{tpu_custom_call.1} parent=31 // pred_check_branch
          %614 = sbr.rel (%p612) target = $region36
        $region35: #{tpu_custom_call.1} parent=31 // pred_region
          %s615 = smul.u32 32, %s22
          %617 = vsyncadd %s608, 0
          %s618 = smul.addr %s21, 32
          %s619 = sadd.s32 %s615, %s618
          %s620 = smul.addr %s619, 8
          %s621 = scalar_lea.hbm %s3, %s620
          %s622 = sshll.u32 %s611, 4
          %s623 = int_to_ptr.vmem [resolvable:$true] %s622
          %s624 = sshll.u32 %s621, 4
          %s625 = int_to_ptr.hbm [resolvable:$true] %s624
          %630 = dma.vmem_to_hbm [thread:$0]  %s623, 4096, %s625, %s608, 128, 128, 8
        $region36: #{tpu_custom_call.1} parent=31 // pred_fallthru
          _
      $region32: #{tpu_custom_call.1} parent=5 // pred_fallthru
        _
      %p631 = scmp.le.s32.totalorder 2, %s12
      // Predicated region
      $region37: #{tpu_custom_call.1} parent=5 // pred_check
        %p632 = pneg %p631
      $region38: #{tpu_custom_call.1} parent=5 // pred_check_branch
        %634 = sbr.rel (%p632) target = $region40
      $region39: #{tpu_custom_call.1} parent=5 // pred_region
        %s635 = ssub.s32 %s12, 2
        // Predicated region
        $region41: #{tpu_custom_call.1} parent=39 // pred_check
          %p636 = pneg %p125
        $region42: #{tpu_custom_call.1} parent=39 // pred_check_branch
          %638 = sbr.rel (%p636) target = $region44
        $region43: #{tpu_custom_call.1} parent=39 // pred_region
          %s639 = sand.u32 %s110, 1
          %s640 = scalar_lea.sflag [#allocation3], %s639
          %s641 = sand.u32 %s110, 1
          %s642 = smul.addr %s641, 256
          %s643 = scalar_lea.vmem [#allocation2], %s642
          %645 = dma.done %s640, 4096
        $region44: #{tpu_custom_call.1} parent=39 // pred_fallthru
          _
      $region40: #{tpu_custom_call.1} parent=5 // pred_fallthru
        _
    $region6: #{tpu_custom_call.1} parent=1 // loop_footer
      %s16 = sadd.s32 1, %s12
    $region7: #{tpu_custom_call.1} parent=1 // loop_footer_branch
      %11 = sbr.rel target = $region3
    $region8: #{tpu_custom_call.1} parent=1 // loop_exit
      _
    %646 = vsyncpa [#allocation3], 1
    %s647 = scalar_lea.sflag [#allocation3], 1
    %648 = vsyncpa %s647, 1

</llo_original>
